<compile_context>
chip_gen: v7x
topology: tpu7x:2x2x1
jax: 0.10.0
libtpu: 0.0.40
codegen_flags: <defaults>
</compile_context>

<pallas_src>
import functools

import jax
import jax.numpy as jnp
from jax.experimental import pallas as pl
from jax.experimental.pallas import tpu as pltpu

IN_DIM = 2
HIDDEN = 64
OUT_DIM = 2


def _round_up(n, m):
    return ((n + m - 1) // m) * m


def _vf_kernel(x_ref, w1_ref, b1_ref, w2_ref, b2_ref, o_ref, *, compute_dtype):
    # Feature-major tiles: x is (IN_DIM, TB), output is (OUT_DIM, TB);
    # batch occupies the 128-lane axis.
    x = x_ref[...].astype(compute_dtype)     # (2, TB)
    w1 = w1_ref[...].astype(compute_dtype)   # (64, 2)  PyTorch (out, in) layout
    b1 = b1_ref[...].astype(compute_dtype)   # (64, 1)
    w2 = w2_ref[...].astype(compute_dtype)   # (2, 64)
    b2 = b2_ref[...]                          # (2, 1)   bias add stays f32

    # Layer 1: K=2 contraction as two VPU rank-1 broadcast MACs.
    h = w1[:, 0:1] * x[0:1, :] + w1[:, 1:2] * x[1:2, :] + b1      # (64, TB)
    # jnp.tanh lowers to a single EUP op on TPU (co-issues with VPU/MXU work).
    h = jnp.tanh(h)

    # Layer 2: K=64 contraction on the MXU, f32 accumulation; lane-dense result.
    y = jnp.dot(w2, h, preferred_element_type=jnp.float32) + b2   # (2, TB)
    o_ref[...] = y.astype(o_ref.dtype)


def _vf_pallas_fm(x_fm, params, *, tb_max=32768, compute_dtype=jnp.float32):
    """Core pallas_call on feature-major activations x_fm: (2, n) -> (2, n) f32."""
    w1, b1, w2, b2 = params          # PyTorch layout: (64,2), (64,), (2,64), (2,)
    n = x_fm.shape[1]

    # Tile sizing:
    #  * tb is always a multiple of 128 (defensive rounding of tb_max).
    #  * Cap at ~half the lane-rounded batch so grid >= 2 whenever possible
    #    (v7x megacore), otherwise take the largest tile up to tb_max.
    tb_max = max(128, (tb_max // 128) * 128)
    n_lanes = _round_up(max(n, 1), 128)
    half = _round_up(pl.cdiv(n_lanes, 2), 128)
    tb = min(tb_max, half)
    grid = (pl.cdiv(n, tb),)

    w1f = w1.astype(jnp.float32)                        # (64, 2)
    b1c = b1.astype(jnp.float32).reshape(HIDDEN, 1)     # (64, 1)
    w2f = w2.astype(jnp.float32)                        # (2, 64)
    b2c = b2.astype(jnp.float32).reshape(OUT_DIM, 1)    # (2, 1)

    param_bytes = 4 * (w1f.size + b1c.size + w2f.size + b2c.size)
    cost = pl.CostEstimate(
        flops=2 * n * (IN_DIM * HIDDEN + HIDDEN * OUT_DIM),
        transcendentals=HIDDEN * n,
        bytes_accessed=4 * n * (IN_DIM + OUT_DIM) + param_bytes,
    )

    return pl.pallas_call(
        functools.partial(_vf_kernel, compute_dtype=compute_dtype),
        out_shape=jax.ShapeDtypeStruct((OUT_DIM, n), jnp.float32),
        grid=grid,
        in_specs=[
            pl.BlockSpec((IN_DIM, tb), lambda i: (0, i)),       # x tile (streamed)
            pl.BlockSpec((HIDDEN, IN_DIM), lambda i: (0, 0)),   # weights resident
            pl.BlockSpec((HIDDEN, 1), lambda i: (0, 0)),
            pl.BlockSpec((OUT_DIM, HIDDEN), lambda i: (0, 0)),
            pl.BlockSpec((OUT_DIM, 1), lambda i: (0, 0)),
        ],
        out_specs=pl.BlockSpec((OUT_DIM, tb), lambda i: (0, i)),  # lane-dense output
        compiler_params=pltpu.CompilerParams(
            dimension_semantics=("parallel",),            # split batch over TCs
            vmem_limit_bytes=48 * 1024 * 1024,            # > 32 MiB scoped default,
        ),                                                # < v7x 64 MiB physical
        cost_estimate=cost,
    )(x_fm, w1f, b1c, w2f, b2c)


def vf_forward_fm(t, x_fm, params, *, tb_max=32768, compute_dtype=jnp.float32):
    """Feature-major hot path for repeated (ODE-solver) calls.

    x_fm: (2, n) float32, returns (2, n) float32 — no layout passes at all.
    `t` is accepted but unused (mirrors VF.forward)."""
    del t
    return _vf_pallas_fm(x_fm, params, tb_max=tb_max, compute_dtype=compute_dtype)


def vf_forward(t, x, params, *, tb_max=32768, compute_dtype=jnp.float32):
    """PyTorch-layout equivalent of VF.forward(t, x): x is (n, 2), returns (n, 2)."""
    del t
    out_dtype = x.dtype
    x_fm = x.astype(jnp.float32).T          # cheap layout pass; no padding pass
    y_fm = _vf_pallas_fm(x_fm, params, tb_max=tb_max, compute_dtype=compute_dtype)
    return y_fm.T.astype(out_dtype)


def init_params(key):
    """nn.Linear-style init U(-1/sqrt(fan_in), +1/sqrt(fan_in)), PyTorch (out,in) layout."""
    k1, k2, k3, k4 = jax.random.split(key, 4)
    bound1 = 1.0 / jnp.sqrt(IN_DIM)
    bound2 = 1.0 / jnp.sqrt(HIDDEN)
    w1 = jax.random.uniform(k1, (HIDDEN, IN_DIM), jnp.float32, -bound1, bound1)
    b1 = jax.random.uniform(k2, (HIDDEN,), jnp.float32, -bound1, bound1)
    w2 = jax.random.uniform(k3, (OUT_DIM, HIDDEN), jnp.float32, -bound2, bound2)
    b2 = jax.random.uniform(k4, (OUT_DIM,), jnp.float32, -bound2, bound2)
    return w1, b1, w2, b2


def _reference(x, params):
    w1, b1, w2, b2 = params
    return jnp.tanh(x @ w1.T + b1) @ w2.T + b2


if __name__ == "__main__":
    key = jax.random.PRNGKey(0)
    kp, kx1, kx2 = jax.random.split(key, 3)
    params = init_params(kp)
    t = jnp.float32(0.0)  # unused, mirrors ODE-style signature

    # Small batch: single tile, ragged (n=8 < 128 lanes) -> partial block path.
    x_small = jax.random.normal(kx1, (8, IN_DIM), jnp.float32)
    y_small = jax.block_until_ready(vf_forward(t, x_small, params))
    assert y_small.shape == (8, OUT_DIM)
    assert jnp.allclose(y_small, _reference(x_small, params), atol=1e-5, rtol=1e-5)

    # Larger ragged batch: 2 grid steps (256 + partial 44) -> exercises the
    # multi-tile pipeline, megacore split, and masked tail stores.
    x_big = jax.random.normal(kx2, (300, IN_DIM), jnp.float32)
    y_big = jax.block_until_ready(vf_forward(t, x_big, params))
    assert y_big.shape == (300, OUT_DIM)
    assert jnp.allclose(y_big, _reference(x_big, params), atol=1e-5, rtol=1e-5)

    # Feature-major hot path (no wrapper transposes), same numerics.
    y_fm = jax.block_until_ready(vf_forward_fm(t, x_big.T, params))
    assert y_fm.shape == (OUT_DIM, 300)
    assert jnp.allclose(y_fm.T, _reference(x_big, params), atol=1e-5, rtol=1e-5)

    print("KERNEL_OK")
</pallas_src>

<mosaic_0001>
module attributes {stable_mosaic.version = 11 : i64} {
  func.func @_vf_kernel(%arg0: i32, %arg1: memref<2x128xf32, #tpu.memory_space<vmem>>, %arg2: memref<64x2xf32, #tpu.memory_space<vmem>>, %arg3: memref<64x1xf32, #tpu.memory_space<vmem>>, %arg4: memref<2x64xf32, #tpu.memory_space<vmem>>, %arg5: memref<2x1xf32, #tpu.memory_space<vmem>>, %arg6: memref<2x128xf32, #tpu.memory_space<vmem>>) attributes {dimension_semantics = [#tpu.dimension_semantics<parallel>], iteration_bounds = array<i64: 1>, scalar_prefetch = 0 : i64, scratch_operands = 0 : i64, tpu.core_type = #tpu.core_type<tc>, window_params = [{transform_indices = @transform_0, window_bounds = array<i64: 2, 128>}, {pipeline_mode = #tpu.pipeline_mode<synchronous>, transform_indices = @transform_1, window_bounds = array<i64: 64, 2>}, {pipeline_mode = #tpu.pipeline_mode<synchronous>, transform_indices = @transform_2, window_bounds = array<i64: 64, 1>}, {pipeline_mode = #tpu.pipeline_mode<synchronous>, transform_indices = @transform_3, window_bounds = array<i64: 2, 64>}, {pipeline_mode = #tpu.pipeline_mode<synchronous>, transform_indices = @transform_4, window_bounds = array<i64: 2, 1>}, {transform_indices = @transform_5, window_bounds = array<i64: 2, 128>}]} {
    %c0 = arith.constant 0 : index
    %c0_0 = arith.constant 0 : index
    %0 = vector.load %arg1[%c0, %c0_0] : memref<2x128xf32, #tpu.memory_space<vmem>>, vector<2x128xf32>
    %c0_1 = arith.constant 0 : index
    %c0_2 = arith.constant 0 : index
    %1 = vector.load %arg2[%c0_1, %c0_2] : memref<64x2xf32, #tpu.memory_space<vmem>>, vector<64x2xf32>
    %c0_3 = arith.constant 0 : index
    %c0_4 = arith.constant 0 : index
    %2 = vector.load %arg3[%c0_3, %c0_4] : memref<64x1xf32, #tpu.memory_space<vmem>>, vector<64x1xf32>
    %c0_5 = arith.constant 0 : index
    %c0_6 = arith.constant 0 : index
    %3 = vector.load %arg4[%c0_5, %c0_6] : memref<2x64xf32, #tpu.memory_space<vmem>>, vector<2x64xf32>
    %c0_7 = arith.constant 0 : index
    %c0_8 = arith.constant 0 : index
    %4 = vector.load %arg5[%c0_7, %c0_8] : memref<2x1xf32, #tpu.memory_space<vmem>>, vector<2x1xf32>
    %5 = vector.extract_strided_slice %1 {offsets = [0, 0], sizes = [64, 1], strides = [1, 1]} : vector<64x2xf32> to vector<64x1xf32>
    %6 = vector.extract_strided_slice %0 {offsets = [0, 0], sizes = [1, 128], strides = [1, 1]} : vector<2x128xf32> to vector<1x128xf32>
    %7 = vector.broadcast %5 : vector<64x1xf32> to vector<64x128xf32>
    %8 = vector.broadcast %6 : vector<1x128xf32> to vector<64x128xf32>
    %9 = arith.mulf %7, %8 : vector<64x128xf32>
    %10 = vector.extract_strided_slice %1 {offsets = [0, 1], sizes = [64, 1], strides = [1, 1]} : vector<64x2xf32> to vector<64x1xf32>
    %11 = vector.extract_strided_slice %0 {offsets = [1, 0], sizes = [1, 128], strides = [1, 1]} : vector<2x128xf32> to vector<1x128xf32>
    %12 = vector.broadcast %10 : vector<64x1xf32> to vector<64x128xf32>
    %13 = vector.broadcast %11 : vector<1x128xf32> to vector<64x128xf32>
    %14 = arith.mulf %12, %13 : vector<64x128xf32>
    %15 = arith.addf %9, %14 : vector<64x128xf32>
    %16 = vector.broadcast %2 : vector<64x1xf32> to vector<64x128xf32>
    %17 = arith.addf %15, %16 : vector<64x128xf32>
    %18 = math.tanh %17 : vector<64x128xf32>
    %cst = arith.constant dense<0.000000e+00> : vector<2x128xf32>
    %19 = tpu.matmul %3, %18, %cst {dimension_numbers = #tpu.dot_dimension_numbers<[1], [0], [0], [1], [0, 0, 1, 1], [], []>} : vector<2x64xf32>, vector<64x128xf32>, vector<2x128xf32> -> vector<2x128xf32>
    %20 = vector.broadcast %4 : vector<2x1xf32> to vector<2x128xf32>
    %21 = arith.addf %19, %20 : vector<2x128xf32>
    %c0_9 = arith.constant 0 : index
    %c0_10 = arith.constant 0 : index
    %22 = vector.load %arg6[%c0_9, %c0_10] : memref<2x128xf32, #tpu.memory_space<vmem>>, vector<2x128xf32>
    tpu.vector_store %arg6[%c0_9, %c0_10], %21 {strides = array<i32>} : memref<2x128xf32, #tpu.memory_space<vmem>>, vector<2x128xf32>,
    return
  }
  func.func @transform_0(%arg0: i32) -> (i32, i32) {
    %c0_i32 = arith.constant 0 : i32
    %c0_i32_0 = arith.constant 0 : i32
    return %c0_i32, %arg0 : i32, i32
  }
  func.func @transform_1(%arg0: i32) -> (i32, i32) {
    %c0_i32 = arith.constant 0 : i32
    %c0_i32_0 = arith.constant 0 : i32
    %c0_i32_1 = arith.constant 0 : i32
    return %c0_i32, %c0_i32_0 : i32, i32
  }
  func.func @transform_2(%arg0: i32) -> (i32, i32) {
    %c0_i32 = arith.constant 0 : i32
    %c0_i32_0 = arith.constant 0 : i32
    %c0_i32_1 = arith.constant 0 : i32
    return %c0_i32, %c0_i32_0 : i32, i32
  }
  func.func @transform_3(%arg0: i32) -> (i32, i32) {
    %c0_i32 = arith.constant 0 : i32
    %c0_i32_0 = arith.constant 0 : i32
    %c0_i32_1 = arith.constant 0 : i32
    return %c0_i32, %c0_i32_0 : i32, i32
  }
  func.func @transform_4(%arg0: i32) -> (i32, i32) {
    %c0_i32 = arith.constant 0 : i32
    %c0_i32_0 = arith.constant 0 : i32
    %c0_i32_1 = arith.constant 0 : i32
    return %c0_i32, %c0_i32_0 : i32, i32
  }
  func.func @transform_5(%arg0: i32) -> (i32, i32) {
    %c0_i32 = arith.constant 0 : i32
    %c0_i32_0 = arith.constant 0 : i32
    return %c0_i32, %arg0 : i32, i32
  }
}

</mosaic_0001>

<llo_original>
// kernel: tpu_custom_call.1
$region0: #{tpu_custom_call.1}
  #allocation0 [shape = 'u32[]', space=smem, size = 0x4, offset = 0x4, fixed_abs, tag = 'smem constant byte address 0x4 - core index']
  #allocation1 [shape = 'u32[144,128]{1,0:T(1,128)}', space=vmem, size = 0x12000, scoped, tag = 'internal scratch']
  %s0 = inlined_call_operand.vmem [shape: f32[2,8], index: 0, kind: input, shape index: {}]
  %s1 = inlined_call_operand.vmem [shape: f32[64,2], index: 1, kind: input, shape index: {}]
  %s2 = inlined_call_operand.vmem [shape: f32[64,1], index: 2, kind: input, shape index: {}]
  %s3 = inlined_call_operand.vmem [shape: f32[2,64], index: 3, kind: input, shape index: {}]
  %s4 = inlined_call_operand.vmem [shape: f32[2,1], index: 4, kind: input, shape index: {}]
  %s5 = inlined_call_operand.hbm [shape: f32[2,8], index: 5, kind: output, shape index: {}]
  %s6 = sld [smem:[#allocation0]]
  $region30: #{tpu_custom_call.1} parent=0
    _
  %s8 = ssub.s32 1, %s6
  %s9 = scalar_select 0, %s8, %s6
  $region1: #{tpu_custom_call.1} parent=0
    #allocation2 [shape = 'u8[1024]{0}', space=vmem, size = 0x400, scoped, tag = 'output window, operand 0, single buffered']
    #allocation3 [shape = 's32[1]{0}', space=sflag, size = 0x4, scoped, tag = 'scoped memory for tpu_custom_call.1']
    %10 = vsyncpa [#allocation3], 0
    // Predicated region
    $region2: #{tpu_custom_call.1} parent=1 // pred_check
      _
    $region3: #{tpu_custom_call.1} parent=1 // pred_check_branch
      %12 = sbr.rel (0) target = $region5
    $region4: #{tpu_custom_call.1} parent=1 // pred_region
      _
    $region5: #{tpu_custom_call.1} parent=1 // pred_fallthru
      _
    // Predicated region
    $region6: #{tpu_custom_call.1} parent=1 // pred_check
      _
    $region7: #{tpu_custom_call.1} parent=1 // pred_check_branch
      %14 = sbr.rel (0) target = $region9
    $region8: #{tpu_custom_call.1} parent=1 // pred_region
      _
    $region9: #{tpu_custom_call.1} parent=1 // pred_fallthru
      _
    // Predicated region
    $region10: #{tpu_custom_call.1} parent=1 // pred_check
      _
    $region11: #{tpu_custom_call.1} parent=1 // pred_check_branch
      %16 = sbr.rel (0) target = $region13
    $region12: #{tpu_custom_call.1} parent=1 // pred_region
      _
    $region13: #{tpu_custom_call.1} parent=1 // pred_fallthru
      _
    // Predicated region
    $region14: #{tpu_custom_call.1} parent=1 // pred_check
      _
    $region15: #{tpu_custom_call.1} parent=1 // pred_check_branch
      %18 = sbr.rel (0) target = $region17
    $region16: #{tpu_custom_call.1} parent=1 // pred_region
      _
    $region17: #{tpu_custom_call.1} parent=1 // pred_fallthru
      _
    // Predicated region
    $region18: #{tpu_custom_call.1} parent=1 // pred_check
      _
    $region19: #{tpu_custom_call.1} parent=1 // pred_check_branch
      %20 = sbr.rel (0) target = $region21
    $region20: #{tpu_custom_call.1} parent=1 // pred_region
      _
    $region21: #{tpu_custom_call.1} parent=1 // pred_fallthru
      _
    %v21 = vld [vmem:[%s0] sm:$0x3]
    %v22 = vld [vmem:[%s1] sm:$0xff]
    %v23 = vld [vmem:[%s1 + $0x8] sm:$0xff]
    %v24 = vld [vmem:[%s1 + $0x10] sm:$0xff]
    %v25 = vld [vmem:[%s1 + $0x18] sm:$0xff]
    %v26 = vld [vmem:[%s1 + $0x20] sm:$0xff]
    %v27 = vld [vmem:[%s1 + $0x28] sm:$0xff]
    %v28 = vld [vmem:[%s1 + $0x30] sm:$0xff]
    %v29 = vld [vmem:[%s1 + $0x38] sm:$0xff]
    %v30 = vld [vmem:[%s2] sm:$0xff]
    %v31 = vld [vmem:[%s2 + $0x8] sm:$0xff]
    %v32 = vld [vmem:[%s2 + $0x10] sm:$0xff]
    %v33 = vld [vmem:[%s2 + $0x18] sm:$0xff]
    %v34 = vld [vmem:[%s2 + $0x20] sm:$0xff]
    %v35 = vld [vmem:[%s2 + $0x28] sm:$0xff]
    %v36 = vld [vmem:[%s2 + $0x30] sm:$0xff]
    %v37 = vld [vmem:[%s2 + $0x38] sm:$0xff]
    %v38 = vld [vmem:[%s3] sm:$0x3]
    %v39 = vld [vmem:[%s4] sm:$0x3]
    %41 = vset.pattern.permute.xlu0 0
    %42 = vperm.xlu0 %41, %v22
    %v43 = vpop.permute.xlu0 %42
    %46 = vset.pattern.permute.xlu0 0
    %47 = vperm.xlu0 %46, %v23
    %v48 = vpop.permute.xlu0 %47
    %51 = vset.pattern.permute.xlu0 0
    %52 = vperm.xlu0 %51, %v24
    %v53 = vpop.permute.xlu0 %52
    %56 = vset.pattern.permute.xlu0 0
    %57 = vperm.xlu0 %56, %v25
    %v58 = vpop.permute.xlu0 %57
    %61 = vset.pattern.permute.xlu0 0
    %62 = vperm.xlu0 %61, %v26
    %v63 = vpop.permute.xlu0 %62
    %66 = vset.pattern.permute.xlu0 0
    %67 = vperm.xlu0 %66, %v27
    %v68 = vpop.permute.xlu0 %67
    %71 = vset.pattern.permute.xlu0 0
    %72 = vperm.xlu0 %71, %v28
    %v73 = vpop.permute.xlu0 %72
    %76 = vset.pattern.permute.xlu0 0
    %77 = vperm.xlu0 %76, %v29
    %v78 = vpop.permute.xlu0 %77
    %v80 = vlaneseq
    %v81 = vshrl.u32 %v80, 7
    %v82 = vsub.s32 0, %v81
    %v83 = vrot.slane %v21, %v82
    %v84 = vmul.f32 %v43, %v83
    %v85 = vmul.f32 %v48, %v83
    %v86 = vmul.f32 %v53, %v83
    %v87 = vmul.f32 %v58, %v83
    %v88 = vmul.f32 %v63, %v83
    %v89 = vmul.f32 %v68, %v83
    %v90 = vmul.f32 %v73, %v83
    %v91 = vmul.f32 %v78, %v83
    %92 = vset.pattern.permute.xlu0 1
    %93 = vperm.xlu0 %92, %v22
    %v94 = vpop.permute.xlu0 %93
    %96 = vset.pattern.permute.xlu0 1
    %97 = vperm.xlu0 %96, %v23
    %v98 = vpop.permute.xlu0 %97
    %100 = vset.pattern.permute.xlu0 1
    %101 = vperm.xlu0 %100, %v24
    %v102 = vpop.permute.xlu0 %101
    %104 = vset.pattern.permute.xlu0 1
    %105 = vperm.xlu0 %104, %v25
    %v106 = vpop.permute.xlu0 %105
    %108 = vset.pattern.permute.xlu0 1
    %109 = vperm.xlu0 %108, %v26
    %v110 = vpop.permute.xlu0 %109
    %112 = vset.pattern.permute.xlu0 1
    %113 = vperm.xlu0 %112, %v27
    %v114 = vpop.permute.xlu0 %113
    %116 = vset.pattern.permute.xlu0 1
    %117 = vperm.xlu0 %116, %v28
    %v118 = vpop.permute.xlu0 %117
    %120 = vset.pattern.permute.xlu0 1
    %121 = vperm.xlu0 %120, %v29
    %v122 = vpop.permute.xlu0 %121
    %v124 = vlaneseq
    %v125 = vshrl.u32 %v124, 7
    %v126 = vsub.s32 1, %v125
    %v127 = vrot.slane %v21, %v126
    %v128 = vmul.f32 %v94, %v127
    %v129 = vmul.f32 %v98, %v127
    %v130 = vmul.f32 %v102, %v127
    %v131 = vmul.f32 %v106, %v127
    %v132 = vmul.f32 %v110, %v127
    %v133 = vmul.f32 %v114, %v127
    %v134 = vmul.f32 %v118, %v127
    %v135 = vmul.f32 %v122, %v127
    %v136 = vadd.f32 %v84, %v128
    %v137 = vadd.f32 %v85, %v129
    %v138 = vadd.f32 %v86, %v130
    %v139 = vadd.f32 %v87, %v131
    %v140 = vadd.f32 %v88, %v132
    %v141 = vadd.f32 %v89, %v133
    %v142 = vadd.f32 %v90, %v134
    %v143 = vadd.f32 %v91, %v135
    %145 = vset.pattern.permute.xlu0 0
    %146 = vperm.xlu0 %145, %v30
    %v147 = vpop.permute.xlu0 %146
    %150 = vset.pattern.permute.xlu0 0
    %151 = vperm.xlu0 %150, %v31
    %v152 = vpop.permute.xlu0 %151
    %155 = vset.pattern.permute.xlu0 0
    %156 = vperm.xlu0 %155, %v32
    %v157 = vpop.permute.xlu0 %156
    %160 = vset.pattern.permute.xlu0 0
    %161 = vperm.xlu0 %160, %v33
    %v162 = vpop.permute.xlu0 %161
    %165 = vset.pattern.permute.xlu0 0
    %166 = vperm.xlu0 %165, %v34
    %v167 = vpop.permute.xlu0 %166
    %170 = vset.pattern.permute.xlu0 0
    %171 = vperm.xlu0 %170, %v35
    %v172 = vpop.permute.xlu0 %171
    %175 = vset.pattern.permute.xlu0 0
    %176 = vperm.xlu0 %175, %v36
    %v177 = vpop.permute.xlu0 %176
    %180 = vset.pattern.permute.xlu0 0
    %181 = vperm.xlu0 %180, %v37
    %v182 = vpop.permute.xlu0 %181
    %v184 = vadd.f32 %v136, %v147
    %v185 = vadd.f32 %v137, %v152
    %v186 = vadd.f32 %v138, %v157
    %v187 = vadd.f32 %v139, %v162
    %v188 = vadd.f32 %v140, %v167
    %v189 = vadd.f32 %v141, %v172
    %v190 = vadd.f32 %v142, %v177
    %v191 = vadd.f32 %v143, %v182
    %v192 = vtanh.pop %v184
    %v193 = vtanh.pop %v185
    %v194 = vtanh.pop %v186
    %v195 = vtanh.pop %v187
    %v196 = vtanh.pop %v188
    %v197 = vtanh.pop %v189
    %v198 = vtanh.pop %v190
    %v199 = vtanh.pop %v191
    %201 = vset.pattern.permute.xlu0 0
    %202 = vperm.xlu0 %201, %v39
    %v203 = vpop.permute.xlu0 %202
    %vm205 = vcmask 523264
    %v207 = vsel %vm205, %v38, 0
    %209 = vmatprep.subr.mxu0 0.0
    %210 = vmatpush1.msra.mxu0 %v192
    %211 = vmatprep.subr.mxu0 0.0
    %212 = vmatpush1.msra.mxu0 %v193
    %213 = vmatprep.subr.mxu0 0.0
    %214 = vmatpush1.msra.mxu0 %v194
    %215 = vmatprep.subr.mxu0 0.0
    %216 = vmatpush1.msra.mxu0 %v195
    %217 = vmatprep.subr.mxu0 0.0
    %218 = vmatpush1.msra.mxu0 %v196
    %219 = vmatprep.subr.mxu0 0.0
    %220 = vmatpush1.msra.mxu0 %v197
    %221 = vmatprep.subr.mxu0 0.0
    %222 = vmatpush1.msra.mxu0 %v198
    %223 = vmatprep.subr.mxu0 0.0
    %224 = vmatpush1.msra.mxu0 %v199
    %225 = vmatprep.subr.mxu0 0.0
    %226 = vmatpush1.msra.mxu0 0.0
    %227 = vmatprep.subr.mxu0 0.0
    %228 = vmatpush1.msra.mxu0 0.0
    %229 = vmatprep.subr.mxu0 0.0
    %230 = vmatpush1.msra.mxu0 0.0
    %231 = vmatprep.subr.mxu0 0.0
    %232 = vmatpush1.msra.mxu0 0.0
    %233 = vmatprep.subr.mxu0 0.0
    %234 = vmatpush1.msra.mxu0 0.0
    %235 = vmatprep.subr.mxu0 0.0
    %236 = vmatpush1.msra.mxu0 0.0
    %237 = vmatprep.subr.mxu0 0.0
    %238 = vmatpush1.msra.mxu0 0.0
    %239 = vmatprep.subr.mxu0 0.0
    %240 = vmatpush1.msra.mxu0 0.0
    %241 = vmatprep.subr.mxu0 0.0
    %242 = vmatpush1.msra.mxu0 0.0
    %243 = vmatprep.subr.mxu0 0.0
    %244 = vmatpush1.msra.mxu0 0.0
    %245 = vmatprep.subr.mxu0 0.0
    %246 = vmatpush1.msra.mxu0 0.0
    %247 = vmatprep.subr.mxu0 0.0
    %248 = vmatpush1.msra.mxu0 0.0
    %249 = vmatprep.subr.mxu0 0.0
    %250 = vmatpush1.msra.mxu0 0.0
    %251 = vmatprep.subr.mxu0 0.0
    %252 = vmatpush1.msra.mxu0 0.0
    %253 = vmatprep.subr.mxu0 0.0
    %254 = vmatpush1.msra.mxu0 0.0
    %255 = vmatprep.subr.mxu0 0.0
    %256 = vmatpush1.msra.mxu0 0.0
    %257 = vmatprep.subr.mxu0 0.0
    %258 = vmatpush1.msra.mxu0 0.0
    %259 = vmatprep.subr.mxu0 0.0
    %260 = vmatpush1.msra.mxu0 0.0
    %261 = vmatprep.subr.mxu0 0.0
    %262 = vmatpush1.msra.mxu0 0.0
    %263 = vmatprep.subr.mxu0 0.0
    %264 = vmatpush1.msra.mxu0 0.0
    %265 = vmatprep.subr.mxu0 0.0
    %266 = vmatpush1.msra.mxu0 0.0
    %267 = vmatprep.subr.mxu0 0.0
    %268 = vmatpush1.msra.mxu0 0.0
    %269 = vmatprep.subr.mxu0 0.0
    %270 = vmatpush1.msra.mxu0 0.0
    %271 = vmatprep.subr.mxu0 0.0
    %272 = vmatpush1.msra.mxu0 0.0
    %273 = vmatprep.mubr.f32.mxu0 0.0
    %274 = vmatmul.mubr.f32.gmra.mrb[0].mxu0 %v207
    %v275 = vpop.f32.mrb[0].mxu0
    %v276 = vadd.f32 %v203, %v275
    %v277 = vpop.f32.mrb[0].mxu0
    %278 = vdwg.mxu0
    %279 = vst [vmem:[#allocation2] sm:$0x3] %v276
    // Predicated region
    $region22: #{tpu_custom_call.1} parent=1 // pred_check
      _
    $region23: #{tpu_custom_call.1} parent=1 // pred_check_branch
      %281 = sbr.rel (0) target = $region25
    $region24: #{tpu_custom_call.1} parent=1 // pred_region
      %s283 = ssub.s32 32, 32
      %284 = vsyncadd [#allocation3], %s283
      %s286 = sshll.u32 [#allocation2], 4
      %s287 = int_to_ptr.vmem [resolvable:$true] %s286
      %289 = dma.vmem_to_hbm [thread:$0]  %s287, 32, %s5, [#allocation3]
    $region25: #{tpu_custom_call.1} parent=1 // pred_fallthru
      _
    // Predicated region
    $region26: #{tpu_custom_call.1} parent=1 // pred_check
      _
    $region27: #{tpu_custom_call.1} parent=1 // pred_check_branch
      %291 = sbr.rel (0) target = $region29
    $region28: #{tpu_custom_call.1} parent=1 // pred_region
      %292 = dma.done [#allocation3], 32
    $region29: #{tpu_custom_call.1} parent=1 // pred_fallthru
      _
    %293 = vsyncpa [#allocation3], 1

</llo_original>
